<compile_context>
chip_gen: v7x
topology: tpu7x:2x2x1
jax: 0.10.0
libtpu: 0.0.40
codegen_flags: <defaults>
</compile_context>

<pallas_src>
import jax
import jax.numpy as jnp
from jax.experimental import pallas as pl
from jax.experimental.pallas import tpu as pltpu


# ~4 MiB per block: GLU is pure HBM-bandwidth-bound and the measured mem-bound
# tiling knee is ~1-4 MiB per tile (amortizes ~0.35 us per grid step).
_TARGET_BLOCK_BYTES = 4 << 20


def _glu_kernel(out_ref, gate_ref, o_ref):
    """out_ref / gate_ref / o_ref: (tp, tf) lane-dense tiles of the two halves."""
    compute_dtype = jnp.bfloat16 if o_ref.dtype == jnp.bfloat16 else jnp.float32
    o = out_ref[...].astype(compute_dtype)
    g = gate_ref[...].astype(compute_dtype)
    # sigmoid(g) = 0.5 * (tanh(g/2) + 1): EUP tanh, no f32 VALU divide.
    # Python-float constants are weakly typed, so this stays in compute_dtype.
    sig = 0.5 * (jnp.tanh(0.5 * g) + 1.0)
    o_ref[...] = (o * sig).astype(o_ref.dtype)


def _round_up(x: int, m: int) -> int:
    return (x + m - 1) // m * m


def _largest_aligned_divisor(n: int, max_val: int, multiple: int) -> int:
    """Largest divisor of n that is a multiple of `multiple` and <= max_val.

    Assumes `multiple` divides n (guaranteed on the fast path, where F is a
    multiple of 128), so there is always a valid answer (worst case `multiple`).
    """
    t = min(max_val, n) // multiple * multiple
    while t >= multiple:
        if n % t == 0:
            return t
        t -= multiple
    return multiple


def _glu_2d(x2: jax.Array, pre: int, F: int) -> jax.Array:
    """Launch the kernel on a (pre, 2*F) view; F must be a multiple of 128."""
    itemsize = jnp.dtype(x2.dtype).itemsize

    # Lane tile first, as wide as the budget allows (assuming the minimal 8-row
    # sublane tile), then derive the row tile from the remaining budget.
    lane_budget = max(128, _TARGET_BLOCK_BYTES // (8 * itemsize))
    tf = _largest_aligned_divisor(F, lane_budget, 128)      # tf | F
    if pre < 8:
        tp = pre                                            # full-extent rows (always legal)
    else:
        tp_desired = max(8, _TARGET_BLOCK_BYTES // (tf * itemsize) // 8 * 8)
        tp = min(tp_desired, pre // 8 * 8)                  # cdiv grid handles the remainder

    gate_off = F // tf                  # block-index offset of the gate half
    grid = (pl.cdiv(pre, tp), F // tf)  # rows may have a padded edge block (elementwise-safe)

    block_bytes = tp * tf * itemsize
    # 2 inputs + 1 output, double-buffered, plus headroom.  >=32 MiB lifts
    # v5e's 16 MiB scoped default; <=48 MiB keeps margin on v7x (64 MiB VMEM).
    vmem_limit = min(48 << 20, max(32 << 20, 6 * block_bytes + (8 << 20)))

    return pl.pallas_call(
        _glu_kernel,
        out_shape=jax.ShapeDtypeStruct((pre, F), x2.dtype),
        grid_spec=pltpu.PrefetchScalarGridSpec(
            num_scalar_prefetch=0,
            grid=grid,
            in_specs=[
                pl.BlockSpec((tp, tf), lambda i, j: (i, j)),             # outputs half
                pl.BlockSpec((tp, tf), lambda i, j: (i, j + gate_off)),  # gate half
            ],
            out_specs=pl.BlockSpec((tp, tf), lambda i, j: (i, j)),
        ),
        compiler_params=pltpu.CompilerParams(
            # TODO(synk): on v7x, pltpu.CORE_PARALLEL on the row axis would make
            # the 2-TensorCore sharding of this mem-bound grid explicit.
            dimension_semantics=("parallel", "parallel"),
            vmem_limit_bytes=vmem_limit,
        ),
    )(x2, x2)   # same array passed twice; each BlockSpec windows its own half


def glu(x: jax.Array, dim: int = 1) -> jax.Array:
    """GLU along `dim`: split in half, return outputs * sigmoid(gate)."""
    dim = dim % x.ndim
    shape = x.shape
    C = shape[dim]
    assert C % 2 == 0, "GLU split dim must be even"

    pre = 1
    for s in shape[:dim]:
        pre *= s
    post = 1
    for s in shape[dim + 1:]:
        post *= s

    half = C // 2
    F = half * post                                   # flattened per-half feature count
    out_shape = shape[:dim] + (half,) + shape[dim + 1:]

    if F % 128 == 0:
        # Fast path: per row, `outputs` occupies the first F lanes and `gate`
        # the last F lanes -> two clean 128-aligned DMA windows of one array.
        out2 = _glu_2d(x.reshape(pre, 2 * F), pre, F)
        return out2.reshape(out_shape)

    # Non-128-aligned per-half feature count: pad the feature axis up to the
    # next multiple of 128 (one extra streaming pass in XLA) and reuse the fast
    # path.  Padded lanes compute 0 * sigmoid(0) and are sliced away.
    F_pad = _round_up(F, 128)
    x3 = jnp.pad(x.reshape(pre, 2, F), ((0, 0), (0, 0), (0, F_pad - F)))
    out2 = _glu_2d(x3.reshape(pre, 2 * F_pad), pre, F_pad)
    return out2[:, :F].reshape(out_shape)


if __name__ == "__main__":
    key = jax.random.PRNGKey(0)
    # NCHW input; channel dim (dim=1) has 8 channels -> output has 4.
    x = jax.random.normal(key, (2, 8, 16, 16), dtype=jnp.float32)

    y = glu(x, dim=1)
    y = jax.block_until_ready(y)

    # Reference check (pure JAX).
    outputs, gate = jnp.split(x, 2, axis=1)
    y_ref = outputs * jax.nn.sigmoid(gate)
    assert y.shape == (2, 4, 16, 16)
    assert jnp.allclose(y, y_ref, atol=1e-5, rtol=1e-5)

    print("KERNEL_OK")
</pallas_src>

<mosaic_0001>
module attributes {stable_mosaic.version = 11 : i64} {
  func.func @_glu_kernel(%arg0: i32, %arg1: i32, %arg2: memref<2x1024xf32, #tpu.memory_space<vmem>>, %arg3: memref<2x1024xf32, #tpu.memory_space<vmem>>, %arg4: memref<2x1024xf32, #tpu.memory_space<vmem>>) attributes {dimension_semantics = [#tpu.dimension_semantics<parallel>, #tpu.dimension_semantics<parallel>], iteration_bounds = array<i64: 1, 1>, scalar_prefetch = 0 : i64, scratch_operands = 0 : i64, tpu.core_type = #tpu.core_type<tc>, window_params = [{transform_indices = @transform_0, window_bounds = array<i64: 2, 1024>}, {transform_indices = @transform_1, window_bounds = array<i64: 2, 1024>}, {transform_indices = @transform_2, window_bounds = array<i64: 2, 1024>}]} {
    %c0 = arith.constant 0 : index
    %c0_0 = arith.constant 0 : index
    %0 = vector.load %arg2[%c0, %c0_0] : memref<2x1024xf32, #tpu.memory_space<vmem>>, vector<2x1024xf32>
    %c0_1 = arith.constant 0 : index
    %c0_2 = arith.constant 0 : index
    %1 = vector.load %arg3[%c0_1, %c0_2] : memref<2x1024xf32, #tpu.memory_space<vmem>>, vector<2x1024xf32>
    %cst = arith.constant 5.000000e-01 : f32
    %2 = vector.broadcast %cst : f32 to vector<2x1024xf32>
    %3 = arith.mulf %2, %1 : vector<2x1024xf32>
    %4 = math.tanh %3 : vector<2x1024xf32>
    %cst_3 = arith.constant 1.000000e+00 : f32
    %5 = vector.broadcast %cst_3 : f32 to vector<2x1024xf32>
    %6 = arith.addf %4, %5 : vector<2x1024xf32>
    %cst_4 = arith.constant 5.000000e-01 : f32
    %7 = vector.broadcast %cst_4 : f32 to vector<2x1024xf32>
    %8 = arith.mulf %7, %6 : vector<2x1024xf32>
    %9 = arith.mulf %0, %8 : vector<2x1024xf32>
    %c0_5 = arith.constant 0 : index
    %c0_6 = arith.constant 0 : index
    %10 = vector.load %arg4[%c0_5, %c0_6] : memref<2x1024xf32, #tpu.memory_space<vmem>>, vector<2x1024xf32>
    tpu.vector_store %arg4[%c0_5, %c0_6], %9 {strides = array<i32>} : memref<2x1024xf32, #tpu.memory_space<vmem>>, vector<2x1024xf32>,
    return
  }
  func.func @transform_0(%arg0: i32, %arg1: i32) -> (i32, i32) {
    %c0_i32 = arith.constant 0 : i32
    return %arg0, %arg1 : i32, i32
  }
  func.func @transform_1(%arg0: i32, %arg1: i32) -> (i32, i32) {
    %c1_i32 = arith.constant 1 : i32
    %0 = arith.addi %arg1, %c1_i32 : i32
    %c0_i32 = arith.constant 0 : i32
    return %arg0, %0 : i32, i32
  }
  func.func @transform_2(%arg0: i32, %arg1: i32) -> (i32, i32) {
    %c0_i32 = arith.constant 0 : i32
    return %arg0, %arg1 : i32, i32
  }
}

</mosaic_0001>

<llo_original>
// kernel: tpu_custom_call.1
$region0: #{tpu_custom_call.1}
  #allocation0 [shape = 'u32[]', space=smem, size = 0x4, offset = 0x4, fixed_abs, tag = 'smem constant byte address 0x4 - core index']
  #allocation1 [shape = 'u32[144,128]{1,0:T(1,128)}', space=vmem, size = 0x12000, scoped, tag = 'internal scratch']
  %s0 = inlined_call_operand.hbm [shape: f32[2,2048], index: 0, kind: input, shape index: {}]
  %s1 = inlined_call_operand.hbm [shape: f32[2,2048], index: 1, kind: input, shape index: {}]
  %s2 = inlined_call_operand.hbm [shape: f32[2,1024], index: 2, kind: output, shape index: {}]
  %s3 = sld [smem:[#allocation0]]
  $region26: #{tpu_custom_call.1} parent=0
    _
  %s5 = ssub.s32 1, %s3
  %s6 = scalar_select 0, %s5, %s3
  $region1: #{tpu_custom_call.1} parent=0
    #allocation2 [shape = 'u8[8192]{0}', space=vmem, size = 0x2000, scoped, tag = 'input window, operand 0, single buffered']
    #allocation3 [shape = 's32[1]{0}', space=sflag, size = 0x4, scoped, tag = 'scoped memory for tpu_custom_call.1']
    #allocation4 [shape = 's32[1]{0}', space=sflag, size = 0x4, scoped, tag = 'scoped memory for tpu_custom_call.1']
    #allocation5 [shape = 'u8[8192]{0}', space=vmem, size = 0x2000, scoped, tag = 'input window, operand 1, single buffered']
    #allocation6 [shape = 's32[1]{0}', space=sflag, size = 0x4, scoped, tag = 'scoped memory for tpu_custom_call.1']
    #allocation7 [shape = 'u8[8192]{0}', space=vmem, size = 0x2000, scoped, tag = 'output window, operand 0, single buffered']
    %7 = vsyncpa [#allocation3], 0
    %8 = vsyncpa [#allocation6], 0
    %9 = vsyncpa [#allocation4], 0
    // Predicated region
    $region2: #{tpu_custom_call.1} parent=1 // pred_check
      _
    $region3: #{tpu_custom_call.1} parent=1 // pred_check_branch
      %11 = sbr.rel (0) target = $region5
    $region4: #{tpu_custom_call.1} parent=1 // pred_region
      %s13 = ssub.s32 256, 256
      %14 = vsyncadd [#allocation3], %s13
      %s16 = sshll.u32 [#allocation2], 4
      %s17 = int_to_ptr.vmem [resolvable:$true] %s16
      %19 = dma.hbm_to_vmem [thread:$0]  %s0, 256, %s17, [#allocation3]
    $region5: #{tpu_custom_call.1} parent=1 // pred_fallthru
      _
    // Predicated region
    $region6: #{tpu_custom_call.1} parent=1 // pred_check
      _
    $region7: #{tpu_custom_call.1} parent=1 // pred_check_branch
      %21 = sbr.rel (0) target = $region9
    $region8: #{tpu_custom_call.1} parent=1 // pred_region
      %s22 = sadd.s32 0, 1
      %s23 = smul.u32 8, %s22
      %s25 = ssub.s32 256, 256
      %26 = vsyncadd [#allocation6], %s25
      %s27 = smul.addr %s23, 32
      %s28 = scalar_lea.hbm %s1, %s27
      %s30 = sshll.u32 [#allocation5], 4
      %s31 = int_to_ptr.vmem [resolvable:$true] %s30
      %33 = dma.hbm_to_vmem [thread:$0]  %s28, 256, %s31, [#allocation6]
    $region9: #{tpu_custom_call.1} parent=1 // pred_fallthru
      _
    // Predicated region
    $region10: #{tpu_custom_call.1} parent=1 // pred_check
      _
    $region11: #{tpu_custom_call.1} parent=1 // pred_check_branch
      %35 = sbr.rel (0) target = $region13
    $region12: #{tpu_custom_call.1} parent=1 // pred_region
      %36 = dma.done [#allocation3], 256
    $region13: #{tpu_custom_call.1} parent=1 // pred_fallthru
      _
    // Predicated region
    $region14: #{tpu_custom_call.1} parent=1 // pred_check
      _
    $region15: #{tpu_custom_call.1} parent=1 // pred_check_branch
      %38 = sbr.rel (0) target = $region17
    $region16: #{tpu_custom_call.1} parent=1 // pred_region
      %39 = dma.done [#allocation6], 256
    $region17: #{tpu_custom_call.1} parent=1 // pred_fallthru
      _
    %s40 = sadd.s32 0, 1
    %s41 = smul.u32 8, %s40
    %v42 = vld [vmem:[#allocation2] sm:$0xff]
    %v43 = vld [vmem:[#allocation2 + $0x8] sm:$0xff]
    %v44 = vld [vmem:[#allocation5] sm:$0xff]
    %v45 = vld [vmem:[#allocation5 + $0x8] sm:$0xff]
    %v46 = vmul.f32 %v44, 0.5
    %v47 = vmul.f32 %v45, 0.5
    %v48 = vtanh.pop %v46
    %v49 = vtanh.pop %v47
    %v50 = vadd.f32 %v48, 1.0
    %v51 = vadd.f32 %v49, 1.0
    %v52 = vmul.f32 %v50, 0.5
    %v53 = vmul.f32 %v51, 0.5
    %v54 = vmul.f32 %v42, %v52
    %v55 = vmul.f32 %v43, %v53
    %56 = vst [vmem:[#allocation7] sm:$0xff] %v54
    %57 = vst [vmem:[#allocation7 + $0x8] sm:$0xff] %v55
    // Predicated region
    $region18: #{tpu_custom_call.1} parent=1 // pred_check
      _
    $region19: #{tpu_custom_call.1} parent=1 // pred_check_branch
      %59 = sbr.rel (0) target = $region21
    $region20: #{tpu_custom_call.1} parent=1 // pred_region
      %s61 = ssub.s32 256, 256
      %62 = vsyncadd [#allocation4], %s61
      %s64 = sshll.u32 [#allocation7], 4
      %s65 = int_to_ptr.vmem [resolvable:$true] %s64
      %67 = dma.vmem_to_hbm [thread:$0]  %s65, 256, %s2, [#allocation4]
    $region21: #{tpu_custom_call.1} parent=1 // pred_fallthru
      _
    // Predicated region
    $region22: #{tpu_custom_call.1} parent=1 // pred_check
      _
    $region23: #{tpu_custom_call.1} parent=1 // pred_check_branch
      %69 = sbr.rel (0) target = $region25
    $region24: #{tpu_custom_call.1} parent=1 // pred_region
      %70 = dma.done [#allocation4], 256
    $region25: #{tpu_custom_call.1} parent=1 // pred_fallthru
      _
    %71 = vsyncpa [#allocation3], 1
    %72 = vsyncpa [#allocation6], 1
    %73 = vsyncpa [#allocation4], 1

</llo_original>
